<compile_context>
chip_gen: v7x
topology: tpu7x:2x2x1
jax: 0.10.0
libtpu: 0.0.40
codegen_flags: <defaults>
</compile_context>

<pallas_src>
import jax
import jax.numpy as jnp
from jax.experimental import pallas as pl
from jax.experimental.pallas import tpu as pltpu

LANE = 128      # vreg lane width
SUBLANE = 8     # f32 sublane count
_MiB = 1024 * 1024


def _round_up(n, m):
    return ((n + m - 1) // m) * m


def _vmem_capacity_bytes():
    # Generation-aware: 64 MiB/TC on v7x, 128 MiB on v5e/v6e.
    try:
        return int(pltpu.get_tpu_info().vmem_capacity_bytes)
    except Exception:
        return 64 * _MiB  # conservative (v7x-sized) fallback


def _vmem_needed(batch_tile, Dp, Op):
    # Weights/biases: single-buffered (Buffered(1)).  x/out tiles: default
    # double-buffered pipeline.  Intermediates: f32 + bf16 copies of h1/h2/out.
    weights = (2 * Dp * Dp + Dp * Op) * 2 + (2 * Dp + Op) * 4
    act_io = 2 * batch_tile * Dp * 2 + 2 * batch_tile * Op * 4
    interm = batch_tile * (2 * Dp + Op) * 8
    return weights + act_io + interm


def fcnn_kernel(x_ref, w1_ref, b1_ref, w2_ref, b2_ref, w4_ref, b4_ref, o_ref):
    # Fused 3-layer MLP on one (TB, Dp) batch tile.  x arrives bf16 (cast was
    # fused into the host-side pad).  Bias add + ReLU stay f32 (v5e-friendly);
    # casts to bf16 only feed the next MXU dot.
    x = x_ref[...]
    h1 = jnp.dot(x, w1_ref[...], preferred_element_type=jnp.float32) + b1_ref[...]
    h1 = jnp.maximum(h1, 0.0).astype(jnp.bfloat16)
    h2 = jnp.dot(h1, w2_ref[...], preferred_element_type=jnp.float32) + b2_ref[...]
    h2 = jnp.maximum(h2, 0.0).astype(jnp.bfloat16)
    out = jnp.dot(h2, w4_ref[...], preferred_element_type=jnp.float32) + b4_ref[...]
    o_ref[...] = out.astype(o_ref.dtype)


def fcnn_forward(x, params, output_size, *, batch_tile=None):
    """x: (B, D) float32 (unpadded); params: padded bf16 weights / f32 biases."""
    B, D = x.shape
    Dp = params["w1"].shape[0]
    Op = params["w4"].shape[1]

    vmem_budget = int(0.85 * _vmem_capacity_bytes())

    Bp_min = _round_up(max(B, SUBLANE), SUBLANE)
    if batch_tile is None:
        # Prefer big tiles (amortize ~0.35us/grid-step + per-dot MXU weight
        # push) while keeping grid >= 2 when there is enough batch so v7x's
        # second TensorCore is not idle.
        if Bp_min >= 1024:
            batch_tile = 512
        elif Bp_min >= 512:
            batch_tile = 256
        elif Bp_min >= 256:
            batch_tile = 128
        else:
            batch_tile = Bp_min
        while batch_tile > SUBLANE and _vmem_needed(batch_tile, Dp, Op) > vmem_budget:
            batch_tile //= 2
        batch_tile = max(SUBLANE, _round_up(batch_tile, SUBLANE))
    Bp = _round_up(Bp_min, batch_tile)

    # Pad + cast activations to bf16 (lane/sublane dense, half the DMA bytes).
    # Fast path: skip the full-tensor pad copy when shapes already line up.
    if Bp == B and Dp == D:
        xp = x.astype(jnp.bfloat16)
    else:
        xp = jnp.zeros((Bp, Dp), jnp.bfloat16).at[:B, :D].set(
            x.astype(jnp.bfloat16))

    grid = (Bp // batch_tile,)
    resident = pl.Buffered(1)   # constant index_map -> single VMEM buffer
    x_spec = pl.BlockSpec((batch_tile, Dp), lambda i: (i, 0))
    o_spec = pl.BlockSpec((batch_tile, Op), lambda i: (i, 0))
    w_dd = pl.BlockSpec((Dp, Dp), lambda i: (0, 0), pipeline_mode=resident)
    w_do = pl.BlockSpec((Dp, Op), lambda i: (0, 0), pipeline_mode=resident)
    b_d = pl.BlockSpec((1, Dp), lambda i: (0, 0), pipeline_mode=resident)
    b_o = pl.BlockSpec((1, Op), lambda i: (0, 0), pipeline_mode=resident)

    flops = 2 * Bp * (2 * Dp * Dp + Dp * Op)
    bytes_accessed = (
        Bp * Dp * 2 + Bp * Op * 4                # bf16 x in, f32 out written
        + (2 * Dp * Dp + Dp * Op) * 2            # bf16 weights (once)
        + (2 * Dp + Op) * 4                      # f32 biases
    )

    vmem_limit = int(min(
        vmem_budget,
        max(16 * _MiB, 3 * _vmem_needed(batch_tile, Dp, Op) // 2)))

    out_padded = pl.pallas_call(
        fcnn_kernel,
        out_shape=jax.ShapeDtypeStruct((Bp, Op), jnp.float32),
        grid=grid,
        in_specs=[x_spec, w_dd, b_d, w_dd, b_d, w_do, b_o],
        out_specs=o_spec,
        compiler_params=pltpu.CompilerParams(
            dimension_semantics=("parallel",),
            vmem_limit_bytes=vmem_limit,
        ),
        cost_estimate=pl.CostEstimate(
            flops=flops, transcendentals=0, bytes_accessed=bytes_accessed),
    )(xp, params["w1"], params["b1"], params["w2"], params["b2"],
      params["w4"], params["b4"])

    return out_padded[:B, :output_size]


def xavier_uniform(key, fan_out, fan_in):
    # torch.nn.init.xavier_uniform_ on a (fan_out, fan_in) weight
    bound = (6.0 / (fan_in + fan_out)) ** 0.5
    return jax.random.uniform(key, (fan_out, fan_in), jnp.float32,
                              minval=-bound, maxval=bound)


def make_params(key, input_size, output_size, time_steps):
    D = input_size * time_steps
    # v6e/v7x MXU is 2x256x256: align large D to 256 so the remainder MXU pass
    # isn't half-utilized; tiny D stays at 128 (extra zero-padding just burns
    # MXU cycles and VMEM).
    align = 256 if D >= 512 else LANE
    Dp = _round_up(D, align)
    Op = _round_up(output_size, LANE)
    k1, k2, k4 = jax.random.split(key, 3)

    def pad_w(w_t, rows, cols):
        # (in, out) layout for x @ W; zero-pad to lane-dense; store bf16.
        out = jnp.zeros((rows, cols), jnp.bfloat16)
        return out.at[:w_t.shape[0], :w_t.shape[1]].set(w_t.astype(jnp.bfloat16))

    # PyTorch Linear stores W as (out, in); transpose to (in, out).
    w1 = pad_w(xavier_uniform(k1, D, D).T, Dp, Dp)
    w2 = pad_w(xavier_uniform(k2, D, D).T, Dp, Dp)
    w4 = pad_w(xavier_uniform(k4, output_size, D).T, Dp, Op)
    b1 = jnp.zeros((1, Dp), jnp.float32).at[:, :D].set(0.01)
    b2 = jnp.zeros((1, Dp), jnp.float32).at[:, :D].set(0.01)
    b4 = jnp.zeros((1, Op), jnp.float32).at[:, :output_size].set(0.01)
    return {"w1": w1, "b1": b1, "w2": w2, "b2": b2, "w4": w4, "b4": b4}


def fcnn_reference(x, params, output_size):
    # Pure-JAX reference on the UNPADDED weight slices (independently checks
    # that the zero padding does not leak into the result).
    D = x.shape[1]
    w1 = params["w1"][:D, :D]
    w2 = params["w2"][:D, :D]
    w4 = params["w4"][:D, :output_size]
    b1 = params["b1"][:, :D]
    b2 = params["b2"][:, :D]
    b4 = params["b4"][:, :output_size]
    h1 = jnp.maximum(jnp.dot(x.astype(jnp.bfloat16), w1,
                             preferred_element_type=jnp.float32) + b1, 0.0)
    h2 = jnp.maximum(jnp.dot(h1.astype(jnp.bfloat16), w2,
                             preferred_element_type=jnp.float32) + b2, 0.0)
    return jnp.dot(h2.astype(jnp.bfloat16), w4,
                   preferred_element_type=jnp.float32) + b4


if __name__ == "__main__":
    # Small shapes consistent with the module: input_size=4, time_steps=8,
    # output_size=8, batch=2  ->  D = 32 (padded to 128 inside).
    input_size, time_steps, output_size, batch = 4, 8, 8, 2
    D = input_size * time_steps

    key = jax.random.PRNGKey(0)
    kx, kp = jax.random.split(key)
    x = jax.random.normal(kx, (batch, D), jnp.float32)
    params = make_params(kp, input_size, output_size, time_steps)

    out = fcnn_forward(x, params, output_size)
    out = jax.block_until_ready(out)

    ref = fcnn_reference(x, params, output_size)
    assert out.shape == (batch, output_size), out.shape
    assert jnp.allclose(out, ref, atol=2e-3, rtol=2e-3), \
        float(jnp.max(jnp.abs(out - ref)))

    print("KERNEL_OK")
</pallas_src>

<mosaic_0001>
module attributes {stable_mosaic.version = 11 : i64} {
  func.func @fcnn_kernel(%arg0: i32, %arg1: memref<8x128xbf16, #tpu.memory_space<vmem>>, %arg2: memref<128x128xbf16, #tpu.memory_space<vmem>>, %arg3: memref<1x128xf32, #tpu.memory_space<vmem>>, %arg4: memref<128x128xbf16, #tpu.memory_space<vmem>>, %arg5: memref<1x128xf32, #tpu.memory_space<vmem>>, %arg6: memref<128x128xbf16, #tpu.memory_space<vmem>>, %arg7: memref<1x128xf32, #tpu.memory_space<vmem>>, %arg8: memref<8x128xf32, #tpu.memory_space<vmem>>) attributes {dimension_semantics = [#tpu.dimension_semantics<parallel>], iteration_bounds = array<i64: 1>, scalar_prefetch = 0 : i64, scratch_operands = 0 : i64, tpu.core_type = #tpu.core_type<tc>, window_params = [{transform_indices = @transform_0, window_bounds = array<i64: 8, 128>}, {pipeline_mode = #tpu.pipeline_mode<synchronous>, transform_indices = @transform_1, window_bounds = array<i64: 128, 128>}, {pipeline_mode = #tpu.pipeline_mode<synchronous>, transform_indices = @transform_2, window_bounds = array<i64: 1, 128>}, {pipeline_mode = #tpu.pipeline_mode<synchronous>, transform_indices = @transform_3, window_bounds = array<i64: 128, 128>}, {pipeline_mode = #tpu.pipeline_mode<synchronous>, transform_indices = @transform_4, window_bounds = array<i64: 1, 128>}, {pipeline_mode = #tpu.pipeline_mode<synchronous>, transform_indices = @transform_5, window_bounds = array<i64: 128, 128>}, {pipeline_mode = #tpu.pipeline_mode<synchronous>, transform_indices = @transform_6, window_bounds = array<i64: 1, 128>}, {transform_indices = @transform_7, window_bounds = array<i64: 8, 128>}]} {
    %c0 = arith.constant 0 : index
    %c0_0 = arith.constant 0 : index
    %0 = vector.load %arg1[%c0, %c0_0] : memref<8x128xbf16, #tpu.memory_space<vmem>>, vector<8x128xbf16>
    %c0_1 = arith.constant 0 : index
    %c0_2 = arith.constant 0 : index
    %1 = vector.load %arg2[%c0_1, %c0_2] : memref<128x128xbf16, #tpu.memory_space<vmem>>, vector<128x128xbf16>
    %cst = arith.constant dense<0.000000e+00> : vector<8x128xf32>
    %2 = tpu.matmul %0, %1, %cst {dimension_numbers = #tpu.dot_dimension_numbers<[1], [0], [0], [1], [0, 0, 1, 1], [], []>} : vector<8x128xbf16>, vector<128x128xbf16>, vector<8x128xf32> -> vector<8x128xf32>
    %c0_3 = arith.constant 0 : index
    %c0_4 = arith.constant 0 : index
    %3 = vector.load %arg3[%c0_3, %c0_4] : memref<1x128xf32, #tpu.memory_space<vmem>>, vector<1x128xf32>
    %4 = vector.broadcast %3 : vector<1x128xf32> to vector<8x128xf32>
    %5 = arith.addf %2, %4 : vector<8x128xf32>
    %cst_5 = arith.constant 0.000000e+00 : f32
    %6 = vector.broadcast %cst_5 : f32 to vector<8x128xf32>
    %7 = arith.maximumf %5, %6 : vector<8x128xf32>
    %8 = arith.truncf %7 : vector<8x128xf32> to vector<8x128xbf16>
    %c0_6 = arith.constant 0 : index
    %c0_7 = arith.constant 0 : index
    %9 = vector.load %arg4[%c0_6, %c0_7] : memref<128x128xbf16, #tpu.memory_space<vmem>>, vector<128x128xbf16>
    %cst_8 = arith.constant dense<0.000000e+00> : vector<8x128xf32>
    %10 = tpu.matmul %8, %9, %cst_8 {dimension_numbers = #tpu.dot_dimension_numbers<[1], [0], [0], [1], [0, 0, 1, 1], [], []>} : vector<8x128xbf16>, vector<128x128xbf16>, vector<8x128xf32> -> vector<8x128xf32>
    %c0_9 = arith.constant 0 : index
    %c0_10 = arith.constant 0 : index
    %11 = vector.load %arg5[%c0_9, %c0_10] : memref<1x128xf32, #tpu.memory_space<vmem>>, vector<1x128xf32>
    %12 = vector.broadcast %11 : vector<1x128xf32> to vector<8x128xf32>
    %13 = arith.addf %10, %12 : vector<8x128xf32>
    %cst_11 = arith.constant 0.000000e+00 : f32
    %14 = vector.broadcast %cst_11 : f32 to vector<8x128xf32>
    %15 = arith.maximumf %13, %14 : vector<8x128xf32>
    %16 = arith.truncf %15 : vector<8x128xf32> to vector<8x128xbf16>
    %c0_12 = arith.constant 0 : index
    %c0_13 = arith.constant 0 : index
    %17 = vector.load %arg6[%c0_12, %c0_13] : memref<128x128xbf16, #tpu.memory_space<vmem>>, vector<128x128xbf16>
    %cst_14 = arith.constant dense<0.000000e+00> : vector<8x128xf32>
    %18 = tpu.matmul %16, %17, %cst_14 {dimension_numbers = #tpu.dot_dimension_numbers<[1], [0], [0], [1], [0, 0, 1, 1], [], []>} : vector<8x128xbf16>, vector<128x128xbf16>, vector<8x128xf32> -> vector<8x128xf32>
    %c0_15 = arith.constant 0 : index
    %c0_16 = arith.constant 0 : index
    %19 = vector.load %arg7[%c0_15, %c0_16] : memref<1x128xf32, #tpu.memory_space<vmem>>, vector<1x128xf32>
    %20 = vector.broadcast %19 : vector<1x128xf32> to vector<8x128xf32>
    %21 = arith.addf %18, %20 : vector<8x128xf32>
    %c0_17 = arith.constant 0 : index
    %c0_18 = arith.constant 0 : index
    %22 = vector.load %arg8[%c0_17, %c0_18] : memref<8x128xf32, #tpu.memory_space<vmem>>, vector<8x128xf32>
    tpu.vector_store %arg8[%c0_17, %c0_18], %21 {strides = array<i32>} : memref<8x128xf32, #tpu.memory_space<vmem>>, vector<8x128xf32>,
    return
  }
  func.func @transform_0(%arg0: i32) -> (i32, i32) {
    %c0_i32 = arith.constant 0 : i32
    %c0_i32_0 = arith.constant 0 : i32
    return %arg0, %c0_i32 : i32, i32
  }
  func.func @transform_1(%arg0: i32) -> (i32, i32) {
    %c0_i32 = arith.constant 0 : i32
    %c0_i32_0 = arith.constant 0 : i32
    %c0_i32_1 = arith.constant 0 : i32
    return %c0_i32, %c0_i32_0 : i32, i32
  }
  func.func @transform_2(%arg0: i32) -> (i32, i32) {
    %c0_i32 = arith.constant 0 : i32
    %c0_i32_0 = arith.constant 0 : i32
    %c0_i32_1 = arith.constant 0 : i32
    return %c0_i32, %c0_i32_0 : i32, i32
  }
  func.func @transform_3(%arg0: i32) -> (i32, i32) {
    %c0_i32 = arith.constant 0 : i32
    %c0_i32_0 = arith.constant 0 : i32
    %c0_i32_1 = arith.constant 0 : i32
    return %c0_i32, %c0_i32_0 : i32, i32
  }
  func.func @transform_4(%arg0: i32) -> (i32, i32) {
    %c0_i32 = arith.constant 0 : i32
    %c0_i32_0 = arith.constant 0 : i32
    %c0_i32_1 = arith.constant 0 : i32
    return %c0_i32, %c0_i32_0 : i32, i32
  }
  func.func @transform_5(%arg0: i32) -> (i32, i32) {
    %c0_i32 = arith.constant 0 : i32
    %c0_i32_0 = arith.constant 0 : i32
    %c0_i32_1 = arith.constant 0 : i32
    return %c0_i32, %c0_i32_0 : i32, i32
  }
  func.func @transform_6(%arg0: i32) -> (i32, i32) {
    %c0_i32 = arith.constant 0 : i32
    %c0_i32_0 = arith.constant 0 : i32
    %c0_i32_1 = arith.constant 0 : i32
    return %c0_i32, %c0_i32_0 : i32, i32
  }
  func.func @transform_7(%arg0: i32) -> (i32, i32) {
    %c0_i32 = arith.constant 0 : i32
    %c0_i32_0 = arith.constant 0 : i32
    return %arg0, %c0_i32 : i32, i32
  }
}

</mosaic_0001>

<llo_original>
// kernel: tpu_custom_call.1
$region0: #{tpu_custom_call.1}
  #allocation0 [shape = 'u32[]', space=smem, size = 0x4, offset = 0x4, fixed_abs, tag = 'smem constant byte address 0x4 - core index']
  #allocation1 [shape = 'u32[144,128]{1,0:T(1,128)}', space=vmem, size = 0x12000, scoped, tag = 'internal scratch']
  %s0 = inlined_call_operand.hbm [shape: bf16[8,128], index: 0, kind: input, shape index: {}]
  %s1 = inlined_call_operand.hbm [shape: bf16[128,128], index: 1, kind: input, shape index: {}]
  %s2 = inlined_call_operand.vmem [shape: f32[1,128], index: 2, kind: input, shape index: {}]
  %s3 = inlined_call_operand.hbm [shape: bf16[128,128], index: 3, kind: input, shape index: {}]
  %s4 = inlined_call_operand.vmem [shape: f32[1,128], index: 4, kind: input, shape index: {}]
  %s5 = inlined_call_operand.hbm [shape: bf16[128,128], index: 5, kind: input, shape index: {}]
  %s6 = inlined_call_operand.vmem [shape: f32[1,128], index: 6, kind: input, shape index: {}]
  %s7 = inlined_call_operand.hbm [shape: f32[8,128], index: 7, kind: output, shape index: {}]
  %s8 = sld [smem:[#allocation0]]
  $region54: #{tpu_custom_call.1} parent=0
    _
  %s10 = ssub.s32 1, %s8
  %s11 = scalar_select 0, %s10, %s8
  $region1: #{tpu_custom_call.1} parent=0
    #allocation2 [shape = 'u8[2048]{0}', space=vmem, size = 0x800, scoped, tag = 'input window, operand 0, single buffered']
    #allocation3 [shape = 's32[1]{0}', space=sflag, size = 0x4, scoped, tag = 'scoped memory for tpu_custom_call.1']
    #allocation4 [shape = 's32[1]{0}', space=sflag, size = 0x4, scoped, tag = 'scoped memory for tpu_custom_call.1']
    #allocation5 [shape = 'u8[32768]{0}', space=vmem, size = 0x8000, scoped, tag = 'input window, operand 1, single buffered']
    #allocation6 [shape = 's32[1]{0}', space=sflag, size = 0x4, scoped, tag = 'scoped memory for tpu_custom_call.1']
    #allocation7 [shape = 'u8[32768]{0}', space=vmem, size = 0x8000, scoped, tag = 'input window, operand 3, single buffered']
    #allocation8 [shape = 'u8[32768]{0}', space=vmem, size = 0x8000, scoped, tag = 'input window, operand 5, single buffered']
    #allocation9 [shape = 's32[1]{0}', space=sflag, size = 0x4, scoped, tag = 'scoped memory for tpu_custom_call.1']
    #allocation10 [shape = 'u8[4096]{0}', space=vmem, size = 0x1000, scoped, tag = 'output window, operand 0, single buffered']
    %12 = vsyncpa [#allocation3], 0
    %13 = vsyncpa [#allocation6], 0
    %14 = vsyncpa [#allocation9], 0
    %15 = vsyncpa [#allocation4], 0
    // Predicated region
    $region2: #{tpu_custom_call.1} parent=1 // pred_check
      _
    $region3: #{tpu_custom_call.1} parent=1 // pred_check_branch
      %17 = sbr.rel (0) target = $region5
    $region4: #{tpu_custom_call.1} parent=1 // pred_region
      %s19 = ssub.s32 64, 64
      %20 = vsyncadd [#allocation3], %s19
      %s22 = sshll.u32 [#allocation2], 4
      %s23 = int_to_ptr.vmem [resolvable:$true] %s22
      %25 = dma.hbm_to_vmem [thread:$0]  %s0, 64, %s23, [#allocation3]
    $region5: #{tpu_custom_call.1} parent=1 // pred_fallthru
      _
    // Predicated region
    $region6: #{tpu_custom_call.1} parent=1 // pred_check
      _
    $region7: #{tpu_custom_call.1} parent=1 // pred_check_branch
      %27 = sbr.rel (0) target = $region9
    $region8: #{tpu_custom_call.1} parent=1 // pred_region
      %s29 = ssub.s32 1024, 1024
      %30 = vsyncadd [#allocation6], %s29
      %s31 = sshll.u32 [#allocation5], 4
      %s32 = int_to_ptr.vmem [resolvable:$true] %s31
      %37 = dma.hbm_to_vmem [thread:$0]  %s1, 1024, %s32, [#allocation6], 64, 64, 4
    $region9: #{tpu_custom_call.1} parent=1 // pred_fallthru
      _
    // Predicated region
    $region10: #{tpu_custom_call.1} parent=1 // pred_check
      _
    $region11: #{tpu_custom_call.1} parent=1 // pred_check_branch
      %39 = sbr.rel (0) target = $region13
    $region12: #{tpu_custom_call.1} parent=1 // pred_region
      _
    $region13: #{tpu_custom_call.1} parent=1 // pred_fallthru
      _
    // Predicated region
    $region14: #{tpu_custom_call.1} parent=1 // pred_check
      _
    $region15: #{tpu_custom_call.1} parent=1 // pred_check_branch
      %41 = sbr.rel (0) target = $region17
    $region16: #{tpu_custom_call.1} parent=1 // pred_region
      %s43 = ssub.s32 1024, 1024
      %44 = vsyncadd [#allocation6], %s43
      %s45 = sshll.u32 [#allocation7], 4
      %s46 = int_to_ptr.vmem [resolvable:$true] %s45
      %51 = dma.hbm_to_vmem [thread:$0]  %s3, 1024, %s46, [#allocation6], 64, 64, 4
    $region17: #{tpu_custom_call.1} parent=1 // pred_fallthru
      _
    // Predicated region
    $region18: #{tpu_custom_call.1} parent=1 // pred_check
      _
    $region19: #{tpu_custom_call.1} parent=1 // pred_check_branch
      %53 = sbr.rel (0) target = $region21
    $region20: #{tpu_custom_call.1} parent=1 // pred_region
      _
    $region21: #{tpu_custom_call.1} parent=1 // pred_fallthru
      _
    // Predicated region
    $region22: #{tpu_custom_call.1} parent=1 // pred_check
      _
    $region23: #{tpu_custom_call.1} parent=1 // pred_check_branch
      %55 = sbr.rel (0) target = $region25
    $region24: #{tpu_custom_call.1} parent=1 // pred_region
      %s57 = ssub.s32 1024, 1024
      %58 = vsyncadd [#allocation9], %s57
      %s59 = sshll.u32 [#allocation8], 4
      %s60 = int_to_ptr.vmem [resolvable:$true] %s59
      %65 = dma.hbm_to_vmem [thread:$0]  %s5, 1024, %s60, [#allocation9], 64, 64, 4
    $region25: #{tpu_custom_call.1} parent=1 // pred_fallthru
      _
    // Predicated region
    $region26: #{tpu_custom_call.1} parent=1 // pred_check
      _
    $region27: #{tpu_custom_call.1} parent=1 // pred_check_branch
      %67 = sbr.rel (0) target = $region29
    $region28: #{tpu_custom_call.1} parent=1 // pred_region
      _
    $region29: #{tpu_custom_call.1} parent=1 // pred_fallthru
      _
    // Predicated region
    $region30: #{tpu_custom_call.1} parent=1 // pred_check
      _
    $region31: #{tpu_custom_call.1} parent=1 // pred_check_branch
      %69 = sbr.rel (0) target = $region33
    $region32: #{tpu_custom_call.1} parent=1 // pred_region
      %70 = dma.done [#allocation3], 64
    $region33: #{tpu_custom_call.1} parent=1 // pred_fallthru
      _
    // Predicated region
    $region34: #{tpu_custom_call.1} parent=1 // pred_check
      _
    $region35: #{tpu_custom_call.1} parent=1 // pred_check_branch
      %72 = sbr.rel (0) target = $region37
    $region36: #{tpu_custom_call.1} parent=1 // pred_region
      %73 = dma.done [#allocation6], 1024
    $region37: #{tpu_custom_call.1} parent=1 // pred_fallthru
      _
    // Predicated region
    $region38: #{tpu_custom_call.1} parent=1 // pred_check
      _
    $region39: #{tpu_custom_call.1} parent=1 // pred_check_branch
      %75 = sbr.rel (0) target = $region41
    $region40: #{tpu_custom_call.1} parent=1 // pred_region
      %76 = dma.done [#allocation6], 1024
    $region41: #{tpu_custom_call.1} parent=1 // pred_fallthru
      _
    // Predicated region
    $region42: #{tpu_custom_call.1} parent=1 // pred_check
      _
    $region43: #{tpu_custom_call.1} parent=1 // pred_check_branch
      %78 = sbr.rel (0) target = $region45
    $region44: #{tpu_custom_call.1} parent=1 // pred_region
      %79 = dma.done [#allocation9], 1024
    $region45: #{tpu_custom_call.1} parent=1 // pred_fallthru
      _
    %v81 = vld [vmem:[#allocation2] sm:$0xf]
    %v82 = vld [vmem:[#allocation5] sm:$0xf]
    %v83 = vld [vmem:[#allocation5 + $0x4] sm:$0xf]
    %v84 = vld [vmem:[#allocation5 + $0x8] sm:$0xf]
    %v85 = vld [vmem:[#allocation5 + $0xc] sm:$0xf]
    %v86 = vld [vmem:[#allocation5 + $0x10] sm:$0xf]
    %v87 = vld [vmem:[#allocation5 + $0x14] sm:$0xf]
    %v88 = vld [vmem:[#allocation5 + $0x18] sm:$0xf]
    %v89 = vld [vmem:[#allocation5 + $0x1c] sm:$0xf]
    %v90 = vld [vmem:[#allocation5 + $0x20] sm:$0xf]
    %v91 = vld [vmem:[#allocation5 + $0x24] sm:$0xf]
    %v92 = vld [vmem:[#allocation5 + $0x28] sm:$0xf]
    %v93 = vld [vmem:[#allocation5 + $0x2c] sm:$0xf]
    %v94 = vld [vmem:[#allocation5 + $0x30] sm:$0xf]
    %v95 = vld [vmem:[#allocation5 + $0x34] sm:$0xf]
    %v96 = vld [vmem:[#allocation5 + $0x38] sm:$0xf]
    %v97 = vld [vmem:[#allocation5 + $0x3c] sm:$0xf]
    %v98 = vld [vmem:[%s2] sm:$0x1]
    %v100 = vlaneseq
    %v101 = vshrl.u32 %v100, 7
    %v102 = vsub.s32 0, %v101
    %v103 = vrot.slane %v98, %v102
    %v121 = vunpack.c.l.b16 %v82
    %v122 = vunpack.c.l.b16 %v83
    %v123 = vunpack.c.l.b16 %v84
    %v124 = vunpack.c.l.b16 %v85
    %v125 = vunpack.c.l.b16 %v86
    %v126 = vunpack.c.l.b16 %v87
    %v127 = vunpack.c.l.b16 %v88
    %v128 = vunpack.c.l.b16 %v89
    %v129 = vunpack.c.l.b16 %v90
    %v130 = vunpack.c.l.b16 %v91
    %v131 = vunpack.c.l.b16 %v92
    %v132 = vunpack.c.l.b16 %v93
    %v133 = vunpack.c.l.b16 %v94
    %v134 = vunpack.c.l.b16 %v95
    %v135 = vunpack.c.l.b16 %v96
    %v136 = vunpack.c.l.b16 %v97
    %v137 = vpack.c.b16 %v122, %v121
    %v138 = vpack.c.b16 %v124, %v123
    %v139 = vpack.c.b16 %v126, %v125
    %v140 = vpack.c.b16 %v128, %v127
    %v141 = vpack.c.b16 %v130, %v129
    %v142 = vpack.c.b16 %v132, %v131
    %v143 = vpack.c.b16 %v134, %v133
    %v144 = vpack.c.b16 %v136, %v135
    %153 = vmatprep.subr.bf16.mxu0 0
    %154 = vmatpush1.bf16.msra.mxu0 %v137
    %155 = vmatprep.subr.bf16.mxu0 0
    %156 = vmatpush1.bf16.msra.mxu0 %v138
    %157 = vmatprep.subr.bf16.mxu0 0
    %158 = vmatpush1.bf16.msra.mxu0 %v139
    %159 = vmatprep.subr.bf16.mxu0 0
    %160 = vmatpush1.bf16.msra.mxu0 %v140
    %161 = vmatprep.subr.bf16.mxu0 0
    %162 = vmatpush1.bf16.msra.mxu0 %v141
    %163 = vmatprep.subr.bf16.mxu0 0
    %164 = vmatpush1.bf16.msra.mxu0 %v142
    %165 = vmatprep.subr.bf16.mxu0 0
    %166 = vmatpush1.bf16.msra.mxu0 %v143
    %167 = vmatprep.subr.bf16.mxu0 0
    %168 = vmatpush1.bf16.msra.mxu0 %v144
    %169 = vmatprep.subr.bf16.mxu0 0
    %170 = vmatpush1.bf16.msra.mxu0 0
    %171 = vmatprep.subr.bf16.mxu0 0
    %172 = vmatpush1.bf16.msra.mxu0 0
    %173 = vmatprep.subr.bf16.mxu0 0
    %174 = vmatpush1.bf16.msra.mxu0 0
    %175 = vmatprep.subr.bf16.mxu0 0
    %176 = vmatpush1.bf16.msra.mxu0 0
    %177 = vmatprep.subr.bf16.mxu0 0
    %178 = vmatpush1.bf16.msra.mxu0 0
    %179 = vmatprep.subr.bf16.mxu0 0
    %180 = vmatpush1.bf16.msra.mxu0 0
    %181 = vmatprep.subr.bf16.mxu0 0
    %182 = vmatpush1.bf16.msra.mxu0 0
    %183 = vmatprep.subr.bf16.mxu0 0
    %184 = vmatpush1.bf16.msra.mxu0 0
    %185 = vmatprep.mubr.bf16.mxu0 0
    %186 = vmatmul.mubr.bf16.gmra.mrb[0].mxu0 %v81
    %v187 = vpop.f32.mrb[0].mxu0
    %v188 = vadd.f32 %v103, %v187
    %v189 = vpop.f32.mrb[0].mxu0
    %v190 = vpop.f32.mrb[0].mxu0
    %v191 = vpop.f32.mrb[0].mxu0
    %192 = vdwg.mxu0
    %v193 = vmax.f32 %v188, 0.0
    %v194 = vpack.c.bf16 %v193, %v193
    %v195 = vld [vmem:[#allocation7] sm:$0xf]
    %v196 = vld [vmem:[#allocation7 + $0x4] sm:$0xf]
    %v197 = vld [vmem:[#allocation7 + $0x8] sm:$0xf]
    %v198 = vld [vmem:[#allocation7 + $0xc] sm:$0xf]
    %v199 = vld [vmem:[#allocation7 + $0x10] sm:$0xf]
    %v200 = vld [vmem:[#allocation7 + $0x14] sm:$0xf]
    %v201 = vld [vmem:[#allocation7 + $0x18] sm:$0xf]
    %v202 = vld [vmem:[#allocation7 + $0x1c] sm:$0xf]
    %v203 = vld [vmem:[#allocation7 + $0x20] sm:$0xf]
    %v204 = vld [vmem:[#allocation7 + $0x24] sm:$0xf]
    %v205 = vld [vmem:[#allocation7 + $0x28] sm:$0xf]
    %v206 = vld [vmem:[#allocation7 + $0x2c] sm:$0xf]
    %v207 = vld [vmem:[#allocation7 + $0x30] sm:$0xf]
    %v208 = vld [vmem:[#allocation7 + $0x34] sm:$0xf]
    %v209 = vld [vmem:[#allocation7 + $0x38] sm:$0xf]
    %v210 = vld [vmem:[#allocation7 + $0x3c] sm:$0xf]
    %v211 = vld [vmem:[%s4] sm:$0x1]
    %v213 = vlaneseq
    %v214 = vshrl.u32 %v213, 7
    %v215 = vsub.s32 0, %v214
    %v216 = vrot.slane %v211, %v215
    %v234 = vunpack.c.l.b16 %v195
    %v235 = vunpack.c.l.b16 %v196
    %v236 = vunpack.c.l.b16 %v197
    %v237 = vunpack.c.l.b16 %v198
    %v238 = vunpack.c.l.b16 %v199
    %v239 = vunpack.c.l.b16 %v200
    %v240 = vunpack.c.l.b16 %v201
    %v241 = vunpack.c.l.b16 %v202
    %v242 = vunpack.c.l.b16 %v203
    %v243 = vunpack.c.l.b16 %v204
    %v244 = vunpack.c.l.b16 %v205
    %v245 = vunpack.c.l.b16 %v206
    %v246 = vunpack.c.l.b16 %v207
    %v247 = vunpack.c.l.b16 %v208
    %v248 = vunpack.c.l.b16 %v209
    %v249 = vunpack.c.l.b16 %v210
    %v250 = vpack.c.b16 %v235, %v234
    %v251 = vpack.c.b16 %v237, %v236
    %v252 = vpack.c.b16 %v239, %v238
    %v253 = vpack.c.b16 %v241, %v240
    %v254 = vpack.c.b16 %v243, %v242
    %v255 = vpack.c.b16 %v245, %v244
    %v256 = vpack.c.b16 %v247, %v246
    %v257 = vpack.c.b16 %v249, %v248
    %266 = vmatprep.subr.bf16.mxu0 0
    %267 = vmatpush1.bf16.msra.mxu0 %v250
    %268 = vmatprep.subr.bf16.mxu0 0
    %269 = vmatpush1.bf16.msra.mxu0 %v251
    %270 = vmatprep.subr.bf16.mxu0 0
    %271 = vmatpush1.bf16.msra.mxu0 %v252
    %272 = vmatprep.subr.bf16.mxu0 0
    %273 = vmatpush1.bf16.msra.mxu0 %v253
    %274 = vmatprep.subr.bf16.mxu0 0
    %275 = vmatpush1.bf16.msra.mxu0 %v254
    %276 = vmatprep.subr.bf16.mxu0 0
    %277 = vmatpush1.bf16.msra.mxu0 %v255
    %278 = vmatprep.subr.bf16.mxu0 0
    %279 = vmatpush1.bf16.msra.mxu0 %v256
    %280 = vmatprep.subr.bf16.mxu0 0
    %281 = vmatpush1.bf16.msra.mxu0 %v257
    %282 = vmatprep.subr.bf16.mxu0 0
    %283 = vmatpush1.bf16.msra.mxu0 0
    %284 = vmatprep.subr.bf16.mxu0 0
    %285 = vmatpush1.bf16.msra.mxu0 0
    %286 = vmatprep.subr.bf16.mxu0 0
    %287 = vmatpush1.bf16.msra.mxu0 0
    %288 = vmatprep.subr.bf16.mxu0 0
    %289 = vmatpush1.bf16.msra.mxu0 0
    %290 = vmatprep.subr.bf16.mxu0 0
    %291 = vmatpush1.bf16.msra.mxu0 0
    %292 = vmatprep.subr.bf16.mxu0 0
    %293 = vmatpush1.bf16.msra.mxu0 0
    %294 = vmatprep.subr.bf16.mxu0 0
    %295 = vmatpush1.bf16.msra.mxu0 0
    %296 = vmatprep.subr.bf16.mxu0 0
    %297 = vmatpush1.bf16.msra.mxu0 0
    %298 = vmatprep.mubr.bf16.mxu0 0
    %299 = vmatmul.mubr.bf16.gmra.mrb[0].mxu0 %v194
    %v300 = vpop.f32.mrb[0].mxu0
    %v301 = vadd.f32 %v216, %v300
    %v302 = vpop.f32.mrb[0].mxu0
    %v303 = vpop.f32.mrb[0].mxu0
    %v304 = vpop.f32.mrb[0].mxu0
    %305 = vdwg.mxu0
    %v306 = vmax.f32 %v301, 0.0
    %v307 = vpack.c.bf16 %v306, %v306
    %v308 = vld [vmem:[#allocation8] sm:$0xf]
    %v309 = vld [vmem:[#allocation8 + $0x4] sm:$0xf]
    %v310 = vld [vmem:[#allocation8 + $0x8] sm:$0xf]
    %v311 = vld [vmem:[#allocation8 + $0xc] sm:$0xf]
    %v312 = vld [vmem:[#allocation8 + $0x10] sm:$0xf]
    %v313 = vld [vmem:[#allocation8 + $0x14] sm:$0xf]
    %v314 = vld [vmem:[#allocation8 + $0x18] sm:$0xf]
    %v315 = vld [vmem:[#allocation8 + $0x1c] sm:$0xf]
    %v316 = vld [vmem:[#allocation8 + $0x20] sm:$0xf]
    %v317 = vld [vmem:[#allocation8 + $0x24] sm:$0xf]
    %v318 = vld [vmem:[#allocation8 + $0x28] sm:$0xf]
    %v319 = vld [vmem:[#allocation8 + $0x2c] sm:$0xf]
    %v320 = vld [vmem:[#allocation8 + $0x30] sm:$0xf]
    %v321 = vld [vmem:[#allocation8 + $0x34] sm:$0xf]
    %v322 = vld [vmem:[#allocation8 + $0x38] sm:$0xf]
    %v323 = vld [vmem:[#allocation8 + $0x3c] sm:$0xf]
    %v324 = vld [vmem:[%s6] sm:$0x1]
    %v326 = vlaneseq
    %v327 = vshrl.u32 %v326, 7
    %v328 = vsub.s32 0, %v327
    %v329 = vrot.slane %v324, %v328
    %v347 = vunpack.c.l.b16 %v308
    %v348 = vunpack.c.l.b16 %v309
    %v349 = vunpack.c.l.b16 %v310
    %v350 = vunpack.c.l.b16 %v311
    %v351 = vunpack.c.l.b16 %v312
    %v352 = vunpack.c.l.b16 %v313
    %v353 = vunpack.c.l.b16 %v314
    %v354 = vunpack.c.l.b16 %v315
    %v355 = vunpack.c.l.b16 %v316
    %v356 = vunpack.c.l.b16 %v317
    %v357 = vunpack.c.l.b16 %v318
    %v358 = vunpack.c.l.b16 %v319
    %v359 = vunpack.c.l.b16 %v320
    %v360 = vunpack.c.l.b16 %v321
    %v361 = vunpack.c.l.b16 %v322
    %v362 = vunpack.c.l.b16 %v323
    %v363 = vpack.c.b16 %v348, %v347
    %v364 = vpack.c.b16 %v350, %v349
    %v365 = vpack.c.b16 %v352, %v351
    %v366 = vpack.c.b16 %v354, %v353
    %v367 = vpack.c.b16 %v356, %v355
    %v368 = vpack.c.b16 %v358, %v357
    %v369 = vpack.c.b16 %v360, %v359
    %v370 = vpack.c.b16 %v362, %v361
    %379 = vmatprep.subr.bf16.mxu0 0
    %380 = vmatpush1.bf16.msra.mxu0 %v363
    %381 = vmatprep.subr.bf16.mxu0 0
    %382 = vmatpush1.bf16.msra.mxu0 %v364
    %383 = vmatprep.subr.bf16.mxu0 0
    %384 = vmatpush1.bf16.msra.mxu0 %v365
    %385 = vmatprep.subr.bf16.mxu0 0
    %386 = vmatpush1.bf16.msra.mxu0 %v366
    %387 = vmatprep.subr.bf16.mxu0 0
    %388 = vmatpush1.bf16.msra.mxu0 %v367
    %389 = vmatprep.subr.bf16.mxu0 0
    %390 = vmatpush1.bf16.msra.mxu0 %v368
    %391 = vmatprep.subr.bf16.mxu0 0
    %392 = vmatpush1.bf16.msra.mxu0 %v369
    %393 = vmatprep.subr.bf16.mxu0 0
    %394 = vmatpush1.bf16.msra.mxu0 %v370
    %395 = vmatprep.subr.bf16.mxu0 0
    %396 = vmatpush1.bf16.msra.mxu0 0
    %397 = vmatprep.subr.bf16.mxu0 0
    %398 = vmatpush1.bf16.msra.mxu0 0
    %399 = vmatprep.subr.bf16.mxu0 0
    %400 = vmatpush1.bf16.msra.mxu0 0
    %401 = vmatprep.subr.bf16.mxu0 0
    %402 = vmatpush1.bf16.msra.mxu0 0
    %403 = vmatprep.subr.bf16.mxu0 0
    %404 = vmatpush1.bf16.msra.mxu0 0
    %405 = vmatprep.subr.bf16.mxu0 0
    %406 = vmatpush1.bf16.msra.mxu0 0
    %407 = vmatprep.subr.bf16.mxu0 0
    %408 = vmatpush1.bf16.msra.mxu0 0
    %409 = vmatprep.subr.bf16.mxu0 0
    %410 = vmatpush1.bf16.msra.mxu0 0
    %411 = vmatprep.mubr.bf16.mxu0 0
    %412 = vmatmul.mubr.bf16.gmra.mrb[0].mxu0 %v307
    %v413 = vpop.f32.mrb[0].mxu0
    %v414 = vadd.f32 %v329, %v413
    %v415 = vpop.f32.mrb[0].mxu0
    %v416 = vpop.f32.mrb[0].mxu0
    %v417 = vpop.f32.mrb[0].mxu0
    %418 = vdwg.mxu0
    %419 = vst [vmem:[#allocation10] sm:$0xff] %v414
    // Predicated region
    $region46: #{tpu_custom_call.1} parent=1 // pred_check
      _
    $region47: #{tpu_custom_call.1} parent=1 // pred_check_branch
      %421 = sbr.rel (0) target = $region49
    $region48: #{tpu_custom_call.1} parent=1 // pred_region
      %s423 = ssub.s32 128, 128
      %424 = vsyncadd [#allocation4], %s423
      %s426 = sshll.u32 [#allocation10], 4
      %s427 = int_to_ptr.vmem [resolvable:$true] %s426
      %429 = dma.vmem_to_hbm [thread:$0]  %s427, 128, %s7, [#allocation4]
    $region49: #{tpu_custom_call.1} parent=1 // pred_fallthru
      _
    // Predicated region
    $region50: #{tpu_custom_call.1} parent=1 // pred_check
      _
    $region51: #{tpu_custom_call.1} parent=1 // pred_check_branch
      %431 = sbr.rel (0) target = $region53
    $region52: #{tpu_custom_call.1} parent=1 // pred_region
      %432 = dma.done [#allocation4], 128
    $region53: #{tpu_custom_call.1} parent=1 // pred_fallthru
      _
    %433 = vsyncpa [#allocation3], 1
    %434 = vsyncpa [#allocation6], 1
    %435 = vsyncpa [#allocation9], 1
    %436 = vsyncpa [#allocation4], 1

</llo_original>
